<compile_context>
chip_gen: v7x
topology: tpu7x:2x2x1
jax: 0.10.0
libtpu: 0.0.40
codegen_flags: <defaults>
</compile_context>

<pallas_src>
import functools

import jax
import jax.numpy as jnp
from jax.experimental import pallas as pl
from jax.experimental.pallas import tpu as pltpu


def _round_up(n, m):
    return ((n + m - 1) // m) * m


def _cdiv(a, b):
    return (a + b - 1) // b


def _loop_classifier_kernel(
    x_ref,       # (tm, D)    tokens (f32 or matmul dtype)
    wfc_ref,     # (D, 2H)    fused gate|value weight   (matmul dtype)
    bfc_ref,     # (1, 2H)    f32
    wproj_ref,   # (2H, D)    rows [H:2H) zero-padded   (matmul dtype)
    bproj_ref,   # (1, D)     f32
    wout_ref,    # (D, Lp)    LN-affine folded, lane-padded (matmul dtype)
    bout_ref,    # (1, Lp)    f32, LN-affine folded, lane-padded
    o_ref,       # (tm, Lp)   f32
):
    mm_dtype = wfc_ref.dtype
    two_h = wfc_ref.shape[1]
    h = two_h // 2

    x_in = x_ref[...]
    x = x_in.astype(jnp.float32)         # residual / LayerNorm path (f32)
    xm = x_in.astype(mm_dtype)           # matmul operand (no-op if same dtype)

    # Single fused fc matmul: (tm, D) @ (D, 2H); 2H = 128 lanes at D = 32.
    fused = jnp.dot(xm, wfc_ref[...], preferred_element_type=jnp.float32)
    fused = fused + bfc_ref[...]

    # Swap halves on the XLU instead of lane-slicing:
    #   swapped[:, :H] = value half (u), swapped[:, H:] = gate half (g).
    swapped = pltpu.roll(fused, shift=h, axis=1)

    # act[:, :H] = silu(g) * u   (the part that matters)
    # act[:, H:] = silu(u) * g   (killed by the zero rows of wproj_pad)
    act = (fused * jax.nn.sigmoid(fused)) * swapped

    m = jnp.dot(act.astype(mm_dtype), wproj_ref[...],
                preferred_element_type=jnp.float32)
    m = m + bproj_ref[...]

    # residual + LayerNorm (eps = 1e-5); affine folded into the head weights.
    r = x + m
    mean = jnp.mean(r, axis=-1, keepdims=True)
    cen = r - mean
    var = jnp.mean(cen * cen, axis=-1, keepdims=True)
    y = cen * jax.lax.rsqrt(var + 1e-5)

    # classifier head (.float() -> f32 accumulation), lane-dense store.
    o_ref[...] = (
        jnp.dot(y.astype(mm_dtype), wout_ref[...],
                preferred_element_type=jnp.float32)
        + bout_ref[...]
    )


@functools.partial(jax.jit, static_argnames=("tm", "matmul_dtype"))
def loop_classifier_forward(x, params, *, tm=1024, matmul_dtype=jnp.bfloat16):
    """x: (B, S, D). Returns (B, S, max_loops) float32."""
    B, S, D = x.shape
    N = B * S

    wfc, bfc, wproj, bproj, gamma, beta, wout, bout = params
    two_h = wfc.shape[1]
    H = two_h // 2
    L = wout.shape[1]
    L_pad = _round_up(max(L, 128), 128)   # lane-dense output

    mmdt = jnp.dtype(matmul_dtype)

    # Token stream: DMA at native width when it already matches the matmul
    # dtype (e.g. bf16 activations); otherwise keep / promote to f32 so the
    # residual & LayerNorm stay exact.  The kernel casts per-path.
    x2 = x.reshape(N, D)
    if x2.dtype not in (jnp.float32, mmdt):
        x2 = x2.astype(jnp.float32)
    xbytes = x2.dtype.itemsize

    # Tile / grid selection:
    #   * >= 2 grid steps whenever possible so v7x's second TensorCore gets
    #     work (dimension_semantics=("parallel",)); harmless on v5e/v6e.
    #   * tm re-derived from ceil(N/steps) so tail padding is < 8*steps
    #     tokens (often zero) instead of up to a full requested tile.
    N_pad8 = _round_up(max(N, 1), 8)
    tm_req = max(8, _round_up(tm, 8))
    min_steps = 2 if N_pad8 >= 16 else 1
    steps = max(min_steps, _cdiv(N_pad8, tm_req))
    tm_eff = _round_up(_cdiv(N_pad8, steps), 8)
    N_pad = tm_eff * steps

    if N_pad != N:
        x2 = jnp.pad(x2, ((0, N_pad - N), (0, 0)))

    # Weights in the matmul dtype (bf16 halves DMA bytes, native MXU path);
    # biases stay f32.  LayerNorm affine folded into the head:
    #   (y*gamma + beta) @ Wout + bout == y @ (diag(gamma) @ Wout)
    #                                     + (beta @ Wout + bout)
    wfc_c = wfc.astype(mmdt)
    wproj_pad = jnp.pad(wproj, ((0, H), (0, 0))).astype(mmdt)      # (2H, D)
    wout_f = gamma.reshape(D, 1) * wout                            # (D, L) f32
    bout_f = beta.reshape(1, D) @ wout + bout                      # (1, L) f32
    wout_c = jnp.pad(wout_f, ((0, 0), (0, L_pad - L))).astype(mmdt)
    bout_c = jnp.pad(bout_f, ((0, 0), (0, L_pad - L)))             # f32

    grid = (steps,)
    tok_spec = pl.BlockSpec((tm_eff, D), lambda i: (i, 0))
    full = lambda shape: pl.BlockSpec(shape, lambda i: (0, 0))

    # Scoped-VMEM estimate from the real footprint: double-buffered token and
    # output tiles + resident weights/biases (x2 buffers) + intermediate
    # headroom.  Cap at 48 MiB (v7x has 64 MiB physical per TensorCore).
    wbytes = mmdt.itemsize
    weight_bytes = ((D * two_h + two_h * D + D * L_pad) * wbytes
                    + (two_h + D + L_pad) * 4)
    est = (
        2 * tm_eff * D * xbytes
        + 2 * tm_eff * L_pad * 4
        + 2 * weight_bytes
        + 6 * tm_eff * two_h * 4
    )
    vmem_limit = int(min(max(2 * est, 16 * 1024 * 1024), 48 * 1024 * 1024))

    cost = pl.CostEstimate(
        flops=2 * N_pad * (D * two_h + two_h * D + D * L_pad),
        transcendentals=N_pad * two_h,
        bytes_accessed=N_pad * D * xbytes + N_pad * L_pad * 4 + weight_bytes,
    )

    out = pl.pallas_call(
        _loop_classifier_kernel,
        out_shape=jax.ShapeDtypeStruct((N_pad, L_pad), jnp.float32),
        grid_spec=pltpu.PrefetchScalarGridSpec(
            num_scalar_prefetch=0,
            grid=grid,
            in_specs=[
                tok_spec,
                full((D, two_h)), full((1, two_h)),
                full((two_h, D)), full((1, D)),
                full((D, L_pad)), full((1, L_pad)),
            ],
            out_specs=pl.BlockSpec((tm_eff, L_pad), lambda i: (i, 0)),
        ),
        compiler_params=pltpu.CompilerParams(
            dimension_semantics=("parallel",),
            vmem_limit_bytes=vmem_limit,
        ),
        cost_estimate=cost,
    )(x2, wfc_c, bfc, wproj_pad, bproj, wout_c, bout_c)

    return out[:N, :L].reshape(B, S, L)


def init_params(key, n_embd, max_loops):
    """Deterministic synthetic init mirroring the PyTorch __init__ shapes.

    GatedMLP(input_dim=n_embd): hidden = 2*n_embd
      fc   : Linear(n_embd, 4*n_embd)  xavier_uniform weight, zero bias
      proj : Linear(2*n_embd, n_embd)  xavier_uniform weight, zero bias
    norm1 : LayerNorm(n_embd)          weight=1, bias=0
    out   : Linear(n_embd, max_loops)  xavier_uniform weight, zero bias
    """
    D = n_embd
    hidden = 2 * D
    k1, k2, k3 = jax.random.split(key, 3)

    def xavier(k, fan_in, fan_out, shape):
        bound = (6.0 / (fan_in + fan_out)) ** 0.5
        return jax.random.uniform(k, shape, jnp.float32, -bound, bound)

    # fc weight: torch (4D, D), stored here transposed as (D, 4D) = (D, 2H),
    # kept fused (gate half = cols [:H], value half = cols [H:]).
    wfc = xavier(k1, D, 2 * hidden, (D, 2 * hidden))
    bfc = jnp.zeros((1, 2 * hidden), jnp.float32)

    wproj = xavier(k2, hidden, D, (hidden, D))
    bproj = jnp.zeros((1, D), jnp.float32)

    gamma = jnp.ones((1, D), jnp.float32)
    beta = jnp.zeros((1, D), jnp.float32)

    wout = xavier(k3, D, max_loops, (D, max_loops))
    bout = jnp.zeros((1, max_loops), jnp.float32)

    return (wfc, bfc, wproj, bproj, gamma, beta, wout, bout)


def reference_forward(x, params):
    """Pure-JAX f32 reference for correctness check."""
    wfc, bfc, wproj, bproj, gamma, beta, wout, bout = params
    H = wfc.shape[1] // 2
    xf = x.astype(jnp.float32)
    fused = xf @ wfc + bfc
    g, u = fused[..., :H], fused[..., H:]
    act = (g * jax.nn.sigmoid(g)) * u
    m = act @ wproj + bproj
    r = xf + m
    mean = jnp.mean(r, axis=-1, keepdims=True)
    var = jnp.mean((r - mean) ** 2, axis=-1, keepdims=True)
    y = (r - mean) * jax.lax.rsqrt(var + 1e-5)
    y = y * gamma + beta
    return (y @ wout + bout).astype(jnp.float32)


if __name__ == "__main__":
    B, S, D = 2, 8, 32          # batch, seq, n_embd (RavenConfig.n_embd)
    MAX_LOOPS = 8

    key = jax.random.PRNGKey(0)
    kx, kp = jax.random.split(key)
    x = jax.random.normal(kx, (B, S, D), jnp.float32)
    params = init_params(kp, D, MAX_LOOPS)

    ref = reference_forward(x, params)

    # f32 matmul path: exact module semantics.
    out = loop_classifier_forward(x, params, matmul_dtype=jnp.float32)
    out = jax.block_until_ready(out)
    assert out.shape == (B, S, MAX_LOOPS)
    assert out.dtype == jnp.float32
    assert jnp.allclose(out, ref, atol=1e-4, rtol=1e-4)

    # Non-default LayerNorm affine -> exercises the wout/bout folding algebra.
    kg, kb = jax.random.split(jax.random.PRNGKey(1))
    gamma2 = 1.0 + 0.1 * jax.random.normal(kg, (1, D), jnp.float32)
    beta2 = 0.1 * jax.random.normal(kb, (1, D), jnp.float32)
    params2 = (params[0], params[1], params[2], params[3],
               gamma2, beta2, params[6], params[7])
    out2 = loop_classifier_forward(x, params2, matmul_dtype=jnp.float32)
    out2 = jax.block_until_ready(out2)
    assert jnp.allclose(out2, reference_forward(x, params2),
                        atol=1e-4, rtol=1e-4)

    # Ragged token count -> exercises the tail-padding / slicing path.
    xr = jax.random.normal(jax.random.PRNGKey(2), (3, 7, D), jnp.float32)
    out3 = loop_classifier_forward(xr, params, matmul_dtype=jnp.float32)
    out3 = jax.block_until_ready(out3)
    assert out3.shape == (3, 7, MAX_LOOPS)
    assert jnp.allclose(out3, reference_forward(xr, params),
                        atol=1e-4, rtol=1e-4)

    # Default (bf16) matmul path: native MXU on v5e/v6e/v7x; LayerNorm /
    # residual stay f32, so only the matmuls see bf16 rounding.
    out_bf16 = loop_classifier_forward(x, params)
    out_bf16 = jax.block_until_ready(out_bf16)
    assert out_bf16.shape == (B, S, MAX_LOOPS)
    assert out_bf16.dtype == jnp.float32
    assert bool(jnp.all(jnp.isfinite(out_bf16)))
    assert jnp.allclose(out_bf16, ref, atol=2e-1, rtol=1e-1)

    print("KERNEL_OK")
</pallas_src>

<mosaic_0001>
module attributes {stable_mosaic.version = 11 : i64} {
  func.func @_loop_classifier_kernel(%arg0: i32, %arg1: memref<8x32xf32, #tpu.memory_space<vmem>>, %arg2: memref<32x128xf32, #tpu.memory_space<vmem>>, %arg3: memref<1x128xf32, #tpu.memory_space<vmem>>, %arg4: memref<128x32xf32, #tpu.memory_space<vmem>>, %arg5: memref<1x32xf32, #tpu.memory_space<vmem>>, %arg6: memref<32x128xf32, #tpu.memory_space<vmem>>, %arg7: memref<1x128xf32, #tpu.memory_space<vmem>>, %arg8: memref<8x128xf32, #tpu.memory_space<vmem>>) attributes {dimension_semantics = [#tpu.dimension_semantics<parallel>], iteration_bounds = array<i64: 2>, scalar_prefetch = 0 : i64, scratch_operands = 0 : i64, tpu.core_type = #tpu.core_type<tc>, window_params = [{transform_indices = @transform_0, window_bounds = array<i64: 8, 32>}, {pipeline_mode = #tpu.pipeline_mode<synchronous>, transform_indices = @transform_1, window_bounds = array<i64: 32, 128>}, {pipeline_mode = #tpu.pipeline_mode<synchronous>, transform_indices = @transform_2, window_bounds = array<i64: 1, 128>}, {pipeline_mode = #tpu.pipeline_mode<synchronous>, transform_indices = @transform_3, window_bounds = array<i64: 128, 32>}, {pipeline_mode = #tpu.pipeline_mode<synchronous>, transform_indices = @transform_4, window_bounds = array<i64: 1, 32>}, {pipeline_mode = #tpu.pipeline_mode<synchronous>, transform_indices = @transform_5, window_bounds = array<i64: 32, 128>}, {pipeline_mode = #tpu.pipeline_mode<synchronous>, transform_indices = @transform_6, window_bounds = array<i64: 1, 128>}, {transform_indices = @transform_7, window_bounds = array<i64: 8, 128>}]} {
    %c0 = arith.constant 0 : index
    %c0_0 = arith.constant 0 : index
    %0 = vector.load %arg1[%c0, %c0_0] : memref<8x32xf32, #tpu.memory_space<vmem>>, vector<8x32xf32>
    %c0_1 = arith.constant 0 : index
    %c0_2 = arith.constant 0 : index
    %1 = vector.load %arg2[%c0_1, %c0_2] : memref<32x128xf32, #tpu.memory_space<vmem>>, vector<32x128xf32>
    %cst = arith.constant dense<0.000000e+00> : vector<8x128xf32>
    %2 = tpu.matmul %0, %1, %cst {dimension_numbers = #tpu.dot_dimension_numbers<[1], [0], [0], [1], [0, 0, 1, 1], [], []>} : vector<8x32xf32>, vector<32x128xf32>, vector<8x128xf32> -> vector<8x128xf32>
    %c0_3 = arith.constant 0 : index
    %c0_4 = arith.constant 0 : index
    %3 = vector.load %arg3[%c0_3, %c0_4] : memref<1x128xf32, #tpu.memory_space<vmem>>, vector<1x128xf32>
    %4 = vector.broadcast %3 : vector<1x128xf32> to vector<8x128xf32>
    %5 = arith.addf %2, %4 : vector<8x128xf32>
    %c64_i32 = arith.constant 64 : i32
    %6 = tpu.dynamic_rotate %5 by %c64_i32 dim 1 : vector<8x128xf32>, i32 -> vector<8x128xf32>
    %7 = arith.negf %5 : vector<8x128xf32>
    %8 = math.exp %7 : vector<8x128xf32>
    %cst_5 = arith.constant 1.000000e+00 : f32
    %9 = vector.broadcast %cst_5 : f32 to vector<8x128xf32>
    %10 = arith.addf %9, %8 : vector<8x128xf32>
    %11 = arith.divf %9, %10 : vector<8x128xf32>
    %12 = arith.mulf %5, %11 : vector<8x128xf32>
    %13 = arith.mulf %12, %6 : vector<8x128xf32>
    %c0_6 = arith.constant 0 : index
    %c0_7 = arith.constant 0 : index
    %14 = vector.load %arg4[%c0_6, %c0_7] : memref<128x32xf32, #tpu.memory_space<vmem>>, vector<128x32xf32>
    %cst_8 = arith.constant dense<0.000000e+00> : vector<8x32xf32>
    %15 = tpu.matmul %13, %14, %cst_8 {dimension_numbers = #tpu.dot_dimension_numbers<[1], [0], [0], [1], [0, 0, 1, 1], [], []>} : vector<8x128xf32>, vector<128x32xf32>, vector<8x32xf32> -> vector<8x32xf32>
    %c0_9 = arith.constant 0 : index
    %c0_10 = arith.constant 0 : index
    %16 = vector.load %arg5[%c0_9, %c0_10] : memref<1x32xf32, #tpu.memory_space<vmem>>, vector<1x32xf32>
    %17 = vector.broadcast %16 : vector<1x32xf32> to vector<8x32xf32>
    %18 = arith.addf %15, %17 : vector<8x32xf32>
    %19 = arith.addf %0, %18 : vector<8x32xf32>
    %cst_11 = arith.constant dense<0.000000e+00> : vector<8xf32>
    %20 = vector.multi_reduction <add>, %19, %cst_11 [1] : vector<8x32xf32> to vector<8xf32>
    %21 = vector.shape_cast %20 : vector<8xf32> to vector<8x1xf32>
    %cst_12 = arith.constant 3.200000e+01 : f32
    %22 = vector.broadcast %cst_12 : f32 to vector<8x1xf32>
    %23 = arith.divf %21, %22 : vector<8x1xf32>
    %24 = vector.broadcast %23 : vector<8x1xf32> to vector<8x32xf32>
    %25 = arith.subf %19, %24 : vector<8x32xf32>
    %26 = arith.mulf %25, %25 : vector<8x32xf32>
    %cst_13 = arith.constant dense<0.000000e+00> : vector<8xf32>
    %27 = vector.multi_reduction <add>, %26, %cst_13 [1] : vector<8x32xf32> to vector<8xf32>
    %28 = vector.shape_cast %27 : vector<8xf32> to vector<8x1xf32>
    %cst_14 = arith.constant 3.200000e+01 : f32
    %29 = vector.broadcast %cst_14 : f32 to vector<8x1xf32>
    %30 = arith.divf %28, %29 : vector<8x1xf32>
    %cst_15 = arith.constant 9.99999974E-6 : f32
    %31 = vector.broadcast %cst_15 : f32 to vector<8x1xf32>
    %32 = arith.addf %30, %31 : vector<8x1xf32>
    %33 = math.rsqrt %32 : vector<8x1xf32>
    %34 = vector.broadcast %33 : vector<8x1xf32> to vector<8x32xf32>
    %35 = arith.mulf %25, %34 : vector<8x32xf32>
    %c0_16 = arith.constant 0 : index
    %c0_17 = arith.constant 0 : index
    %36 = vector.load %arg6[%c0_16, %c0_17] : memref<32x128xf32, #tpu.memory_space<vmem>>, vector<32x128xf32>
    %cst_18 = arith.constant dense<0.000000e+00> : vector<8x128xf32>
    %37 = tpu.matmul %35, %36, %cst_18 {dimension_numbers = #tpu.dot_dimension_numbers<[1], [0], [0], [1], [0, 0, 1, 1], [], []>} : vector<8x32xf32>, vector<32x128xf32>, vector<8x128xf32> -> vector<8x128xf32>
    %c0_19 = arith.constant 0 : index
    %c0_20 = arith.constant 0 : index
    %38 = vector.load %arg7[%c0_19, %c0_20] : memref<1x128xf32, #tpu.memory_space<vmem>>, vector<1x128xf32>
    %39 = vector.broadcast %38 : vector<1x128xf32> to vector<8x128xf32>
    %40 = arith.addf %37, %39 : vector<8x128xf32>
    %c0_21 = arith.constant 0 : index
    %c0_22 = arith.constant 0 : index
    %41 = vector.load %arg8[%c0_21, %c0_22] : memref<8x128xf32, #tpu.memory_space<vmem>>, vector<8x128xf32>
    tpu.vector_store %arg8[%c0_21, %c0_22], %40 {strides = array<i32>} : memref<8x128xf32, #tpu.memory_space<vmem>>, vector<8x128xf32>,
    return
  }
  func.func @transform_0(%arg0: i32) -> (i32, i32) {
    %c0_i32 = arith.constant 0 : i32
    %c0_i32_0 = arith.constant 0 : i32
    return %arg0, %c0_i32 : i32, i32
  }
  func.func @transform_1(%arg0: i32) -> (i32, i32) {
    %c0_i32 = arith.constant 0 : i32
    %c0_i32_0 = arith.constant 0 : i32
    %c0_i32_1 = arith.constant 0 : i32
    return %c0_i32, %c0_i32_0 : i32, i32
  }
  func.func @transform_2(%arg0: i32) -> (i32, i32) {
    %c0_i32 = arith.constant 0 : i32
    %c0_i32_0 = arith.constant 0 : i32
    %c0_i32_1 = arith.constant 0 : i32
    return %c0_i32, %c0_i32_0 : i32, i32
  }
  func.func @transform_3(%arg0: i32) -> (i32, i32) {
    %c0_i32 = arith.constant 0 : i32
    %c0_i32_0 = arith.constant 0 : i32
    %c0_i32_1 = arith.constant 0 : i32
    return %c0_i32, %c0_i32_0 : i32, i32
  }
  func.func @transform_4(%arg0: i32) -> (i32, i32) {
    %c0_i32 = arith.constant 0 : i32
    %c0_i32_0 = arith.constant 0 : i32
    %c0_i32_1 = arith.constant 0 : i32
    return %c0_i32, %c0_i32_0 : i32, i32
  }
  func.func @transform_5(%arg0: i32) -> (i32, i32) {
    %c0_i32 = arith.constant 0 : i32
    %c0_i32_0 = arith.constant 0 : i32
    %c0_i32_1 = arith.constant 0 : i32
    return %c0_i32, %c0_i32_0 : i32, i32
  }
  func.func @transform_6(%arg0: i32) -> (i32, i32) {
    %c0_i32 = arith.constant 0 : i32
    %c0_i32_0 = arith.constant 0 : i32
    %c0_i32_1 = arith.constant 0 : i32
    return %c0_i32, %c0_i32_0 : i32, i32
  }
  func.func @transform_7(%arg0: i32) -> (i32, i32) {
    %c0_i32 = arith.constant 0 : i32
    %c0_i32_0 = arith.constant 0 : i32
    return %arg0, %c0_i32 : i32, i32
  }
}

</mosaic_0001>

<llo_original>
// kernel: loop_classifier_forward.1
$region0: #{loop_classifier_forward.1}
  #allocation0 [shape = 'u32[]', space=smem, size = 0x4, offset = 0x4, fixed_abs, tag = 'smem constant byte address 0x4 - core index']
  #allocation1 [shape = 'u32[144,128]{1,0:T(1,128)}', space=vmem, size = 0x12000, scoped, tag = 'internal scratch']
  %s0 = inlined_call_operand.vmem [shape: f32[16,32], index: 0, kind: input, shape index: {}]
  %s1 = inlined_call_operand.vmem [shape: f32[32,128], index: 1, kind: input, shape index: {}]
  %s2 = inlined_call_operand.vmem [shape: f32[1,128], index: 2, kind: input, shape index: {}]
  %s3 = inlined_call_operand.vmem [shape: f32[128,32], index: 3, kind: input, shape index: {}]
  %s4 = inlined_call_operand.vmem [shape: f32[1,32], index: 4, kind: input, shape index: {}]
  %s5 = inlined_call_operand.vmem [shape: f32[32,128], index: 5, kind: input, shape index: {}]
  %s6 = inlined_call_operand.vmem [shape: f32[1,128], index: 6, kind: input, shape index: {}]
  %s7 = inlined_call_operand.vmem [shape: f32[16,128], index: 7, kind: output, shape index: {}]
  %s8 = sld [smem:[#allocation0]]
  $region61: #{loop_classifier_forward.1} parent=0
    _
  %s10 = ssub.s32 1, %s8
  %s11 = scalar_select 0, %s10, %s8
  loop: start=0, step=1, limit=4
  $region2: #{loop_classifier_forward.1} parent=0 // loop_pre_header
    _
  $region3: #{loop_classifier_forward.1} parent=0 // loop_header
    %s13 = sphi 0, %s17
    %p14 = scmp.ge.s32.totalorder %s13, 4
    %s23 = sphi 0, %s25
    %s26 = sphi 0, %s23
    %s27 = sphi 0, %s26
    %s43 = sphi 0, %s27
    %s47 = sphi 0, %s47
    %s49 = sphi 0, %s47
    %s50 = sphi 0, %s49
    %s64 = sphi 0, %s50
    %s68 = sphi 0, %s68
    %s70 = sphi 0, %s68
    %s71 = sphi 0, %s70
    %s85 = sphi 0, %s71
    %s89 = sphi 0, %s89
    %s91 = sphi 0, %s89
    %s92 = sphi 0, %s91
    %s106 = sphi 0, %s92
    %s110 = sphi 0, %s110
    %s112 = sphi 0, %s110
    %s113 = sphi 0, %s112
    %s127 = sphi 0, %s113
    %s131 = sphi 0, %s131
    %s133 = sphi 0, %s131
    %s134 = sphi 0, %s133
    %s148 = sphi 0, %s134
    %s152 = sphi 0, %s152
    %s154 = sphi 0, %s152
    %s155 = sphi 0, %s154
    %s169 = sphi 0, %s155
    %s175 = sphi 0, %s177
    %s178 = sphi 0, %s175
    %s179 = sphi 0, %s178
    %s195 = sphi 0, %s179
  $region4: #{loop_classifier_forward.1} parent=0 // loop_header_branch
    %16 = sbr.rel (%p14) target = $region8
  $region5: #{loop_classifier_forward.1} parent=0 // loop_body
    %s18 = ssub.s32 %s13, 1
    %s19 = ssub.s32 %s13, 2
    %s20 = sadd.s32 %s13, 1
    %s21 = ssub.s32 %s13, %s20
    %p22 = scmp.eq.s32.totalorder %s21, 0
    %s24 = sadd.s32 %s23, 1
    %s25 = scalar_select %p22, %s23, %s24
    %p28 = pneg %p22
    %p29 = scmp.eq.s32.totalorder %s13, 1
    %p30 = por %p28, %p29
    %p31 = scmp.ne.s32.totalorder %s23, %s26
    %p32 = scmp.eq.s32.totalorder %s13, 0
    %p33 = por %p31, %p32
    %p34 = scmp.ne.s32.totalorder %s23, %s26
    %p35 = scmp.eq.s32.totalorder %s18, 1
    %p36 = por %p34, %p35
    %p37 = scmp.ne.s32.totalorder %s26, %s27
    %p38 = scmp.eq.s32.totalorder %s18, 0
    %p39 = por %p37, %p38
    %p40 = scmp.ne.s32.totalorder %s26, %s27
    %p41 = scmp.eq.s32.totalorder %s19, 1
    %p42 = por %p40, %p41
    %p44 = scmp.ne.s32.totalorder %s27, %s43
    %p45 = scmp.eq.s32.totalorder %s19, 0
    %p46 = por %p44, %p45
    %s48 = sadd.s32 %s47, 1
    %p51 = scmp.eq.s32.totalorder %s13, 1
    %p52 = scmp.ne.s32.totalorder %s47, %s49
    %p53 = scmp.eq.s32.totalorder %s13, 0
    %p54 = por %p52, %p53
    %p55 = scmp.ne.s32.totalorder %s47, %s49
    %p56 = scmp.eq.s32.totalorder %s18, 1
    %p57 = por %p55, %p56
    %p58 = scmp.ne.s32.totalorder %s49, %s50
    %p59 = scmp.eq.s32.totalorder %s18, 0
    %p60 = por %p58, %p59
    %p61 = scmp.ne.s32.totalorder %s49, %s50
    %p62 = scmp.eq.s32.totalorder %s19, 1
    %p63 = por %p61, %p62
    %p65 = scmp.ne.s32.totalorder %s50, %s64
    %p66 = scmp.eq.s32.totalorder %s19, 0
    %p67 = por %p65, %p66
    %s69 = sadd.s32 %s68, 1
    %p72 = scmp.eq.s32.totalorder %s13, 1
    %p73 = scmp.ne.s32.totalorder %s68, %s70
    %p74 = scmp.eq.s32.totalorder %s13, 0
    %p75 = por %p73, %p74
    %p76 = scmp.ne.s32.totalorder %s68, %s70
    %p77 = scmp.eq.s32.totalorder %s18, 1
    %p78 = por %p76, %p77
    %p79 = scmp.ne.s32.totalorder %s70, %s71
    %p80 = scmp.eq.s32.totalorder %s18, 0
    %p81 = por %p79, %p80
    %p82 = scmp.ne.s32.totalorder %s70, %s71
    %p83 = scmp.eq.s32.totalorder %s19, 1
    %p84 = por %p82, %p83
    %p86 = scmp.ne.s32.totalorder %s71, %s85
    %p87 = scmp.eq.s32.totalorder %s19, 0
    %p88 = por %p86, %p87
    %s90 = sadd.s32 %s89, 1
    %p93 = scmp.eq.s32.totalorder %s13, 1
    %p94 = scmp.ne.s32.totalorder %s89, %s91
    %p95 = scmp.eq.s32.totalorder %s13, 0
    %p96 = por %p94, %p95
    %p97 = scmp.ne.s32.totalorder %s89, %s91
    %p98 = scmp.eq.s32.totalorder %s18, 1
    %p99 = por %p97, %p98
    %p100 = scmp.ne.s32.totalorder %s91, %s92
    %p101 = scmp.eq.s32.totalorder %s18, 0
    %p102 = por %p100, %p101
    %p103 = scmp.ne.s32.totalorder %s91, %s92
    %p104 = scmp.eq.s32.totalorder %s19, 1
    %p105 = por %p103, %p104
    %p107 = scmp.ne.s32.totalorder %s92, %s106
    %p108 = scmp.eq.s32.totalorder %s19, 0
    %p109 = por %p107, %p108
    %s111 = sadd.s32 %s110, 1
    %p114 = scmp.eq.s32.totalorder %s13, 1
    %p115 = scmp.ne.s32.totalorder %s110, %s112
    %p116 = scmp.eq.s32.totalorder %s13, 0
    %p117 = por %p115, %p116
    %p118 = scmp.ne.s32.totalorder %s110, %s112
    %p119 = scmp.eq.s32.totalorder %s18, 1
    %p120 = por %p118, %p119
    %p121 = scmp.ne.s32.totalorder %s112, %s113
    %p122 = scmp.eq.s32.totalorder %s18, 0
    %p123 = por %p121, %p122
    %p124 = scmp.ne.s32.totalorder %s112, %s113
    %p125 = scmp.eq.s32.totalorder %s19, 1
    %p126 = por %p124, %p125
    %p128 = scmp.ne.s32.totalorder %s113, %s127
    %p129 = scmp.eq.s32.totalorder %s19, 0
    %p130 = por %p128, %p129
    %s132 = sadd.s32 %s131, 1
    %p135 = scmp.eq.s32.totalorder %s13, 1
    %p136 = scmp.ne.s32.totalorder %s131, %s133
    %p137 = scmp.eq.s32.totalorder %s13, 0
    %p138 = por %p136, %p137
    %p139 = scmp.ne.s32.totalorder %s131, %s133
    %p140 = scmp.eq.s32.totalorder %s18, 1
    %p141 = por %p139, %p140
    %p142 = scmp.ne.s32.totalorder %s133, %s134
    %p143 = scmp.eq.s32.totalorder %s18, 0
    %p144 = por %p142, %p143
    %p145 = scmp.ne.s32.totalorder %s133, %s134
    %p146 = scmp.eq.s32.totalorder %s19, 1
    %p147 = por %p145, %p146
    %p149 = scmp.ne.s32.totalorder %s134, %s148
    %p150 = scmp.eq.s32.totalorder %s19, 0
    %p151 = por %p149, %p150
    %s153 = sadd.s32 %s152, 1
    %p156 = scmp.eq.s32.totalorder %s13, 1
    %p157 = scmp.ne.s32.totalorder %s152, %s154
    %p158 = scmp.eq.s32.totalorder %s13, 0
    %p159 = por %p157, %p158
    %p160 = scmp.ne.s32.totalorder %s152, %s154
    %p161 = scmp.eq.s32.totalorder %s18, 1
    %p162 = por %p160, %p161
    %p163 = scmp.ne.s32.totalorder %s154, %s155
    %p164 = scmp.eq.s32.totalorder %s18, 0
    %p165 = por %p163, %p164
    %p166 = scmp.ne.s32.totalorder %s154, %s155
    %p167 = scmp.eq.s32.totalorder %s19, 1
    %p168 = por %p166, %p167
    %p170 = scmp.ne.s32.totalorder %s155, %s169
    %p171 = scmp.eq.s32.totalorder %s19, 0
    %p172 = por %p170, %p171
    %s173 = ssub.s32 %s13, %s20
    %p174 = scmp.eq.s32.totalorder %s173, 0
    %s176 = sadd.s32 %s175, 1
    %s177 = scalar_select %p174, %s175, %s176
    %p180 = pneg %p174
    %p181 = scmp.eq.s32.totalorder %s13, 1
    %p182 = por %p180, %p181
    %p183 = scmp.ne.s32.totalorder %s175, %s178
    %p184 = scmp.eq.s32.totalorder %s13, 0
    %p185 = por %p183, %p184
    %p186 = scmp.ne.s32.totalorder %s175, %s178
    %p187 = scmp.eq.s32.totalorder %s18, 1
    %p188 = por %p186, %p187
    %p189 = scmp.ne.s32.totalorder %s178, %s179
    %p190 = scmp.eq.s32.totalorder %s18, 0
    %p191 = por %p189, %p190
    %p192 = scmp.ne.s32.totalorder %s178, %s179
    %p193 = scmp.eq.s32.totalorder %s19, 1
    %p194 = por %p192, %p193
    %p196 = scmp.ne.s32.totalorder %s179, %s195
    %p197 = scmp.eq.s32.totalorder %s19, 0
    %p198 = por %p196, %p197
    %p199 = scmp.le.s32.totalorder 1, %s13
    %p200 = scmp.lt.s32.totalorder %s13, 3
    %p201 = pnand %p199, %p200
    %p202 = pneg %p201
    // Predicated region
    $region9: #{loop_classifier_forward.1} parent=5 // pred_check
      _
    $region10: #{loop_classifier_forward.1} parent=5 // pred_check_branch
      %204 = sbr.rel (%p201) target = $region12
    $region11: #{loop_classifier_forward.1} parent=5 // pred_region
      %s205 = ssub.s32 %s13, 1
      // Predicated region
      $region13: #{loop_classifier_forward.1} parent=11 // pred_check
        %p206 = pneg %p60
      $region14: #{loop_classifier_forward.1} parent=11 // pred_check_branch
        %208 = sbr.rel (%p206) target = $region16
      $region15: #{loop_classifier_forward.1} parent=11 // pred_region
        _
      $region16: #{loop_classifier_forward.1} parent=11 // pred_fallthru
        _
      // Predicated region
      $region17: #{loop_classifier_forward.1} parent=11 // pred_check
        %p209 = pneg %p81
      $region18: #{loop_classifier_forward.1} parent=11 // pred_check_branch
        %211 = sbr.rel (%p209) target = $region20
      $region19: #{loop_classifier_forward.1} parent=11 // pred_region
        _
      $region20: #{loop_classifier_forward.1} parent=11 // pred_fallthru
        _
      // Predicated region
      $region21: #{loop_classifier_forward.1} parent=11 // pred_check
        %p212 = pneg %p102
      $region22: #{loop_classifier_forward.1} parent=11 // pred_check_branch
        %214 = sbr.rel (%p212) target = $region24
      $region23: #{loop_classifier_forward.1} parent=11 // pred_region
        _
      $region24: #{loop_classifier_forward.1} parent=11 // pred_fallthru
        _
      // Predicated region
      $region25: #{loop_classifier_forward.1} parent=11 // pred_check
        %p215 = pneg %p123
      $region26: #{loop_classifier_forward.1} parent=11 // pred_check_branch
        %217 = sbr.rel (%p215) target = $region28
      $region27: #{loop_classifier_forward.1} parent=11 // pred_region
        _
      $region28: #{loop_classifier_forward.1} parent=11 // pred_fallthru
        _
      // Predicated region
      $region29: #{loop_classifier_forward.1} parent=11 // pred_check
        %p218 = pneg %p144
      $region30: #{loop_classifier_forward.1} parent=11 // pred_check_branch
        %220 = sbr.rel (%p218) target = $region32
      $region31: #{loop_classifier_forward.1} parent=11 // pred_region
        _
      $region32: #{loop_classifier_forward.1} parent=11 // pred_fallthru
        _
      // Predicated region
      $region33: #{loop_classifier_forward.1} parent=11 // pred_check
        %p221 = pneg %p165
      $region34: #{loop_classifier_forward.1} parent=11 // pred_check_branch
        %223 = sbr.rel (%p221) target = $region36
      $region35: #{loop_classifier_forward.1} parent=11 // pred_region
        _
      $region36: #{loop_classifier_forward.1} parent=11 // pred_fallthru
        _
    $region12: #{loop_classifier_forward.1} parent=5 // pred_fallthru
      _
    %p224 = scmp.lt.s32.totalorder %s13, 2
    // Predicated region
    $region37: #{loop_classifier_forward.1} parent=5 // pred_check
      %p225 = pneg %p224
    $region38: #{loop_classifier_forward.1} parent=5 // pred_check_branch
      %227 = sbr.rel (%p225) target = $region40
    $region39: #{loop_classifier_forward.1} parent=5 // pred_region
      // Predicated region
      $region41: #{loop_classifier_forward.1} parent=39 // pred_check
        %p228 = pneg %p33
      $region42: #{loop_classifier_forward.1} parent=39 // pred_check_branch
        %230 = sbr.rel (%p228) target = $region44
      $region43: #{loop_classifier_forward.1} parent=39 // pred_region
        %p231 = scmp.lt.s32.totalorder %s13, 1
        %s232 = scalar_select %p231, %s13, 1
        %s233 = smul.addr %s232, 8
        %s234 = scalar_lea.vmem %s0, %s233
      $region44: #{loop_classifier_forward.1} parent=39 // pred_fallthru
        _
    $region40: #{loop_classifier_forward.1} parent=5 // pred_fallthru
      _
    %p235 = scmp.le.s32.totalorder 1, %s13
    %p236 = scmp.lt.s32.totalorder %s13, 3
    %p237 = pnand %p235, %p236
    %p238 = pneg %p237
    // Predicated region
    $region45: #{loop_classifier_forward.1} parent=5 // pred_check
      _
    $region46: #{loop_classifier_forward.1} parent=5 // pred_check_branch
      %240 = sbr.rel (%p237) target = $region48
    $region47: #{loop_classifier_forward.1} parent=5 // pred_region
      %s241 = ssub.s32 %s13, 1
      %p242 = scmp.lt.s32.totalorder %s18, 1
      %s243 = scalar_select %p242, %s18, 1
      %s244 = smul.addr %s243, 8
      %s245 = scalar_lea.vmem %s0, %s244
      %p246 = pneg %p39
      %p247 = pneg %p36
      %p248 = pneg %p60
      %p249 = pneg %p57
      %p250 = pneg %p81
      %p251 = pneg %p78
      %p252 = pneg %p102
      %p253 = pneg %p99
      %p254 = pneg %p123
      %p255 = pneg %p120
      %p256 = pneg %p144
      %p257 = pneg %p141
      %p258 = pneg %p165
      %p259 = pneg %p162
      %p260 = pneg %p191
      %p261 = pneg %p188
      %p262 = scmp.lt.s32.totalorder %s18, 1
      %s263 = scalar_select %p262, %s18, 1
      %s264 = smul.addr %s263, 8
      %s265 = scalar_lea.vmem %s7, %s264
      %p266 = scmp.lt.s32.totalorder %s18, 1
      %s267 = scalar_select %p266, %s18, 1
      %s268 = smul.addr %s267, 8
      %s269 = scalar_lea.vmem %s0, %s268
      %p270 = scmp.lt.s32.totalorder %s18, 1
      %s271 = scalar_select %p270, %s18, 1
      %s272 = smul.addr %s271, 8
      %s273 = scalar_lea.vmem %s7, %s272
      %v274 = vld [vmem:[%s269] sm:$0xff]
      %v275 = vld [vmem:[%s1] sm:$0xff]
      %v276 = vld [vmem:[%s1 + $0x8] sm:$0xff]
      %v277 = vld [vmem:[%s1 + $0x10] sm:$0xff]
      %v278 = vld [vmem:[%s1 + $0x18] sm:$0xff]
      %v279 = vld [vmem:[%s2] sm:$0x1]
      %v281 = vlaneseq
      %v282 = vshrl.u32 %v281, 7
      %v283 = vsub.s32 0, %v282
      %v284 = vrot.slane %v279, %v283
      %vm286 = vcmask 261120
      %v288 = vsel %vm286, %v274, 0
      %290 = vmatprep.subr.mxu0 0.0
      %291 = vmatpush1.msra.mxu0 %v275
      %292 = vmatprep.subr.mxu0 0.0
      %293 = vmatpush1.msra.mxu0 %v276
      %294 = vmatprep.subr.mxu0 0.0
      %295 = vmatpush1.msra.mxu0 %v277
      %296 = vmatprep.subr.mxu0 0.0
      %297 = vmatpush1.msra.mxu0 %v278
      %298 = vmatprep.subr.mxu0 0.0
      %299 = vmatpush1.msra.mxu0 0.0
      %300 = vmatprep.subr.mxu0 0.0
      %301 = vmatpush1.msra.mxu0 0.0
      %302 = vmatprep.subr.mxu0 0.0
      %303 = vmatpush1.msra.mxu0 0.0
      %304 = vmatprep.subr.mxu0 0.0
      %305 = vmatpush1.msra.mxu0 0.0
      %306 = vmatprep.subr.mxu0 0.0
      %307 = vmatpush1.msra.mxu0 0.0
      %308 = vmatprep.subr.mxu0 0.0
      %309 = vmatpush1.msra.mxu0 0.0
      %310 = vmatprep.subr.mxu0 0.0
      %311 = vmatpush1.msra.mxu0 0.0
      %312 = vmatprep.subr.mxu0 0.0
      %313 = vmatpush1.msra.mxu0 0.0
      %314 = vmatprep.subr.mxu0 0.0
      %315 = vmatpush1.msra.mxu0 0.0
      %316 = vmatprep.subr.mxu0 0.0
      %317 = vmatpush1.msra.mxu0 0.0
      %318 = vmatprep.subr.mxu0 0.0
      %319 = vmatpush1.msra.mxu0 0.0
      %320 = vmatprep.subr.mxu0 0.0
      %321 = vmatpush1.msra.mxu0 0.0
      %322 = vmatprep.subr.mxu0 0.0
      %323 = vmatpush1.msra.mxu0 0.0
      %324 = vmatprep.subr.mxu0 0.0
      %325 = vmatpush1.msra.mxu0 0.0
      %326 = vmatprep.subr.mxu0 0.0
      %327 = vmatpush1.msra.mxu0 0.0
      %328 = vmatprep.subr.mxu0 0.0
      %329 = vmatpush1.msra.mxu0 0.0
      %330 = vmatprep.subr.mxu0 0.0
      %331 = vmatpush1.msra.mxu0 0.0
      %332 = vmatprep.subr.mxu0 0.0
      %333 = vmatpush1.msra.mxu0 0.0
      %334 = vmatprep.subr.mxu0 0.0
      %335 = vmatpush1.msra.mxu0 0.0
      %336 = vmatprep.subr.mxu0 0.0
      %337 = vmatpush1.msra.mxu0 0.0
      %338 = vmatprep.subr.mxu0 0.0
      %339 = vmatpush1.msra.mxu0 0.0
      %340 = vmatprep.subr.mxu0 0.0
      %341 = vmatpush1.msra.mxu0 0.0
      %342 = vmatprep.subr.mxu0 0.0
      %343 = vmatpush1.msra.mxu0 0.0
      %344 = vmatprep.subr.mxu0 0.0
      %345 = vmatpush1.msra.mxu0 0.0
      %346 = vmatprep.subr.mxu0 0.0
      %347 = vmatpush1.msra.mxu0 0.0
      %348 = vmatprep.subr.mxu0 0.0
      %349 = vmatpush1.msra.mxu0 0.0
      %350 = vmatprep.subr.mxu0 0.0
      %351 = vmatpush1.msra.mxu0 0.0
      %352 = vmatprep.subr.mxu0 0.0
      %353 = vmatpush1.msra.mxu0 0.0
      %354 = vmatprep.mubr.f32.mxu0 0.0
      %355 = vmatmul.mubr.f32.gmra.mrb[0].mxu0 %v288
      %v356 = vpop.f32.mrb[0].mxu0
      %v357 = vadd.f32 %v284, %v356
      %v358 = vpop.f32.mrb[0].mxu0
      %359 = vdwg.mxu0
      %360 = vrot.lane.b32.xlu0 %v357, 64
      %v361 = vpop.permute.xlu0 %360
      %v362 = vxor.u32 %v357, 2147483648
      %v363 = vmul.f32 %v362, 1.442695
      %v364 = vpow.pop %v363
      %v365 = vadd.f32 %v364, 1.0
      %v366 = vrcp.pop %v365
      %v367 = vmul.f32 1.0, %v366
      %v368 = vmul.f32 %v357, %v367
      %v369 = vmul.f32 %v368, %v361
      %v370 = vld [vmem:[%s3] sm:$0xff]
      %v371 = vld [vmem:[%s3 + $0x8] sm:$0xff]
      %v372 = vld [vmem:[%s3 + $0x10] sm:$0xff]
      %v373 = vld [vmem:[%s3 + $0x18] sm:$0xff]
      %v374 = vld [vmem:[%s3 + $0x20] sm:$0xff]
      %v375 = vld [vmem:[%s3 + $0x28] sm:$0xff]
      %v376 = vld [vmem:[%s3 + $0x30] sm:$0xff]
      %v377 = vld [vmem:[%s3 + $0x38] sm:$0xff]
      %v378 = vld [vmem:[%s3 + $0x40] sm:$0xff]
      %v379 = vld [vmem:[%s3 + $0x48] sm:$0xff]
      %v380 = vld [vmem:[%s3 + $0x50] sm:$0xff]
      %v381 = vld [vmem:[%s3 + $0x58] sm:$0xff]
      %v382 = vld [vmem:[%s3 + $0x60] sm:$0xff]
      %v383 = vld [vmem:[%s3 + $0x68] sm:$0xff]
      %v384 = vld [vmem:[%s3 + $0x70] sm:$0xff]
      %v385 = vld [vmem:[%s3 + $0x78] sm:$0xff]
      %v386 = vld [vmem:[%s4] sm:$0x1]
      %v388 = vlaneseq
      %v389 = vshrl.u32 %v388, 7
      %v390 = vsub.s32 0, %v389
      %v391 = vrot.slane %v386, %v390
      %393 = vmatprep.subr.mxu0 0.0
      %394 = vmatpush1.msra.mxu0 %v370
      %395 = vmatprep.subr.mxu0 0.0
      %396 = vmatpush1.msra.mxu0 %v371
      %397 = vmatprep.subr.mxu0 0.0
      %398 = vmatpush1.msra.mxu0 %v372
      %399 = vmatprep.subr.mxu0 0.0
      %400 = vmatpush1.msra.mxu0 %v373
      %401 = vmatprep.subr.mxu0 0.0
      %402 = vmatpush1.msra.mxu0 %v374
      %403 = vmatprep.subr.mxu0 0.0
      %404 = vmatpush1.msra.mxu0 %v375
      %405 = vmatprep.subr.mxu0 0.0
      %406 = vmatpush1.msra.mxu0 %v376
      %407 = vmatprep.subr.mxu0 0.0
      %408 = vmatpush1.msra.mxu0 %v377
      %409 = vmatprep.subr.mxu0 0.0
      %410 = vmatpush1.msra.mxu0 %v378
      %411 = vmatprep.subr.mxu0 0.0
      %412 = vmatpush1.msra.mxu0 %v379
      %413 = vmatprep.subr.mxu0 0.0
      %414 = vmatpush1.msra.mxu0 %v380
      %415 = vmatprep.subr.mxu0 0.0
      %416 = vmatpush1.msra.mxu0 %v381
      %417 = vmatprep.subr.mxu0 0.0
      %418 = vmatpush1.msra.mxu0 %v382
      %419 = vmatprep.subr.mxu0 0.0
      %420 = vmatpush1.msra.mxu0 %v383
      %421 = vmatprep.subr.mxu0 0.0
      %422 = vmatpush1.msra.mxu0 %v384
      %423 = vmatprep.subr.mxu0 0.0
      %424 = vmatpush1.msra.mxu0 %v385
      %425 = vmatprep.subr.mxu0 0.0
      %426 = vmatpush1.msra.mxu0 0.0
      %427 = vmatprep.subr.mxu0 0.0
      %428 = vmatpush1.msra.mxu0 0.0
      %429 = vmatprep.subr.mxu0 0.0
      %430 = vmatpush1.msra.mxu0 0.0
      %431 = vmatprep.subr.mxu0 0.0
      %432 = vmatpush1.msra.mxu0 0.0
      %433 = vmatprep.subr.mxu0 0.0
      %434 = vmatpush1.msra.mxu0 0.0
      %435 = vmatprep.subr.mxu0 0.0
      %436 = vmatpush1.msra.mxu0 0.0
      %437 = vmatprep.subr.mxu0 0.0
      %438 = vmatpush1.msra.mxu0 0.0
      %439 = vmatprep.subr.mxu0 0.0
      %440 = vmatpush1.msra.mxu0 0.0
      %441 = vmatprep.subr.mxu0 0.0
      %442 = vmatpush1.msra.mxu0 0.0
      %443 = vmatprep.subr.mxu0 0.0
      %444 = vmatpush1.msra.mxu0 0.0
      %445 = vmatprep.subr.mxu0 0.0
      %446 = vmatpush1.msra.mxu0 0.0
      %447 = vmatprep.subr.mxu0 0.0
      %448 = vmatpush1.msra.mxu0 0.0
      %449 = vmatprep.subr.mxu0 0.0
      %450 = vmatpush1.msra.mxu0 0.0
      %451 = vmatprep.subr.mxu0 0.0
      %452 = vmatpush1.msra.mxu0 0.0
      %453 = vmatprep.subr.mxu0 0.0
      %454 = vmatpush1.msra.mxu0 0.0
      %455 = vmatprep.subr.mxu0 0.0
      %456 = vmatpush1.msra.mxu0 0.0
      %457 = vmatprep.mubr.f32.mxu0 0.0
      %458 = vmatmul.mubr.f32.gmra.mrb[0].mxu0 %v369
      %v459 = vpop.f32.mrb[0].mxu0
      %v460 = vadd.f32 %v391, %v459
      %v461 = vpop.f32.mrb[0].mxu0
      %462 = vdwg.mxu0
      %v463 = vadd.f32 %v274, %v460
      %v464 = vsel %vm286, %v463, 0.0
      %465 = vadd.xlane.f32.xlu0 %v464
      %v466 = vpop.xlane.xlu0 %465
      %v467 = vrcp.pop 32.0
      %v468 = vmul.f32 %v466, %v467
      %v469 = vsub.f32 %v463, %v468
      %v470 = vmul.f32 %v469, %v469
      %v471 = vsel %vm286, %v470, 0.0
      %472 = vadd.xlane.f32.xlu0 %v471
      %v473 = vpop.xlane.xlu0 %472
      %v474 = vmul.f32 %v473, %v467
      %v475 = vadd.f32 %v474, 1e-05
      %v476 = vrsqrt.pop %v475
      %v477 = vmul.f32 %v469, %v476
      %v478 = vld [vmem:[%s5] sm:$0xff]
      %v479 = vld [vmem:[%s5 + $0x8] sm:$0xff]
      %v480 = vld [vmem:[%s5 + $0x10] sm:$0xff]
      %v481 = vld [vmem:[%s5 + $0x18] sm:$0xff]
      %v482 = vld [vmem:[%s6] sm:$0x1]
      %v484 = vlaneseq
      %v485 = vshrl.u32 %v484, 7
      %v486 = vsub.s32 0, %v485
      %v487 = vrot.slane %v482, %v486
      %v490 = vsel %vm286, %v477, 0
      %492 = vmatprep.subr.mxu0 0.0
      %493 = vmatpush1.msra.mxu0 %v478
      %494 = vmatprep.subr.mxu0 0.0
      %495 = vmatpush1.msra.mxu0 %v479
      %496 = vmatprep.subr.mxu0 0.0
      %497 = vmatpush1.msra.mxu0 %v480
      %498 = vmatprep.subr.mxu0 0.0
      %499 = vmatpush1.msra.mxu0 %v481
      %500 = vmatprep.subr.mxu0 0.0
      %501 = vmatpush1.msra.mxu0 0.0
      %502 = vmatprep.subr.mxu0 0.0
      %503 = vmatpush1.msra.mxu0 0.0
      %504 = vmatprep.subr.mxu0 0.0
      %505 = vmatpush1.msra.mxu0 0.0
      %506 = vmatprep.subr.mxu0 0.0
      %507 = vmatpush1.msra.mxu0 0.0
      %508 = vmatprep.subr.mxu0 0.0
      %509 = vmatpush1.msra.mxu0 0.0
      %510 = vmatprep.subr.mxu0 0.0
      %511 = vmatpush1.msra.mxu0 0.0
      %512 = vmatprep.subr.mxu0 0.0
      %513 = vmatpush1.msra.mxu0 0.0
      %514 = vmatprep.subr.mxu0 0.0
      %515 = vmatpush1.msra.mxu0 0.0
      %516 = vmatprep.subr.mxu0 0.0
      %517 = vmatpush1.msra.mxu0 0.0
      %518 = vmatprep.subr.mxu0 0.0
      %519 = vmatpush1.msra.mxu0 0.0
      %520 = vmatprep.subr.mxu0 0.0
      %521 = vmatpush1.msra.mxu0 0.0
      %522 = vmatprep.subr.mxu0 0.0
      %523 = vmatpush1.msra.mxu0 0.0
      %524 = vmatprep.subr.mxu0 0.0
      %525 = vmatpush1.msra.mxu0 0.0
      %526 = vmatprep.subr.mxu0 0.0
      %527 = vmatpush1.msra.mxu0 0.0
      %528 = vmatprep.subr.mxu0 0.0
      %529 = vmatpush1.msra.mxu0 0.0
      %530 = vmatprep.subr.mxu0 0.0
      %531 = vmatpush1.msra.mxu0 0.0
      %532 = vmatprep.subr.mxu0 0.0
      %533 = vmatpush1.msra.mxu0 0.0
      %534 = vmatprep.subr.mxu0 0.0
      %535 = vmatpush1.msra.mxu0 0.0
      %536 = vmatprep.subr.mxu0 0.0
      %537 = vmatpush1.msra.mxu0 0.0
      %538 = vmatprep.subr.mxu0 0.0
      %539 = vmatpush1.msra.mxu0 0.0
      %540 = vmatprep.subr.mxu0 0.0
      %541 = vmatpush1.msra.mxu0 0.0
      %542 = vmatprep.subr.mxu0 0.0
      %543 = vmatpush1.msra.mxu0 0.0
      %544 = vmatprep.subr.mxu0 0.0
      %545 = vmatpush1.msra.mxu0 0.0
      %546 = vmatprep.subr.mxu0 0.0
      %547 = vmatpush1.msra.mxu0 0.0
      %548 = vmatprep.subr.mxu0 0.0
      %549 = vmatpush1.msra.mxu0 0.0
      %550 = vmatprep.subr.mxu0 0.0
      %551 = vmatpush1.msra.mxu0 0.0
      %552 = vmatprep.subr.mxu0 0.0
      %553 = vmatpush1.msra.mxu0 0.0
      %554 = vmatprep.subr.mxu0 0.0
      %555 = vmatpush1.msra.mxu0 0.0
      %556 = vmatprep.mubr.f32.mxu0 0.0
      %557 = vmatmul.mubr.f32.gmra.mrb[0].mxu0 %v490
      %v558 = vpop.f32.mrb[0].mxu0
      %v559 = vadd.f32 %v487, %v558
      %v560 = vpop.f32.mrb[0].mxu0
      %561 = vdwg.mxu0
      %562 = vst [vmem:[%s273] sm:$0xff] %v559
      %p563 = scmp.lt.s32.totalorder %s18, 1
      %s564 = scalar_select %p563, %s18, 1
      %s565 = smul.addr %s564, 8
      %s566 = scalar_lea.vmem %s7, %s565
      // Predicated region
      $region49: #{loop_classifier_forward.1} parent=47 // pred_check
        %p567 = pneg %p188
      $region50: #{loop_classifier_forward.1} parent=47 // pred_check_branch
        %569 = sbr.rel (%p567) target = $region52
      $region51: #{loop_classifier_forward.1} parent=47 // pred_region
        _
      $region52: #{loop_classifier_forward.1} parent=47 // pred_fallthru
        _
    $region48: #{loop_classifier_forward.1} parent=5 // pred_fallthru
      _
    %p570 = scmp.le.s32.totalorder 2, %s13
    // Predicated region
    $region53: #{loop_classifier_forward.1} parent=5 // pred_check
      %p571 = pneg %p570
    $region54: #{loop_classifier_forward.1} parent=5 // pred_check_branch
      %573 = sbr.rel (%p571) target = $region56
    $region55: #{loop_classifier_forward.1} parent=5 // pred_region
      %s574 = ssub.s32 %s13, 2
      // Predicated region
      $region57: #{loop_classifier_forward.1} parent=55 // pred_check
        %p575 = pneg %p194
      $region58: #{loop_classifier_forward.1} parent=55 // pred_check_branch
        %577 = sbr.rel (%p575) target = $region60
      $region59: #{loop_classifier_forward.1} parent=55 // pred_region
        %p578 = scmp.lt.s32.totalorder %s19, 1
        %s579 = scalar_select %p578, %s19, 1
        %s580 = smul.addr %s579, 8
        %s581 = scalar_lea.vmem %s7, %s580
      $region60: #{loop_classifier_forward.1} parent=55 // pred_fallthru
        _
    $region56: #{loop_classifier_forward.1} parent=5 // pred_fallthru
      _
  $region6: #{loop_classifier_forward.1} parent=0 // loop_footer
    %s17 = sadd.s32 1, %s13
  $region7: #{loop_classifier_forward.1} parent=0 // loop_footer_branch
    %12 = sbr.rel target = $region3
  $region8: #{loop_classifier_forward.1} parent=0 // loop_exit
    _

</llo_original>
